<compile_context>
chip_gen: v6e
topology: v6e:2x2x1
jax: 0.10.0
libtpu: 0.0.40
codegen_flags: <defaults>
</compile_context>

<pallas_src>
import functools
import math

import jax
import jax.numpy as jnp
from jax.experimental import pallas as pl
from jax.experimental.pallas import tpu as pltpu

LN_EPS = 1e-12                       # BERT LayerNorm epsilon


# ----------------------------------------------------------------------------
# Tiling / compiler-parameter helpers
# ----------------------------------------------------------------------------
def _pick_tile(dim, preferred, mult=128):
    """Largest tile <= preferred that divides dim.

    Prefers multiples of `mult` (128 for lane dims, 8 for sublane dims) so
    real BERT dims (768 / 2304 / 3072) get 384/512 tiles instead of silently
    collapsing to a full-dim block.
    """
    if dim <= preferred:
        return dim
    start = preferred - (preferred % mult)
    for t in range(start, mult - 1, -mult):
        if dim % t == 0:
            return t
    for t in range(preferred, 0, -1):        # last resort: any divisor
        if dim % t == 0:
            return t
    return dim


@functools.lru_cache(maxsize=None)
def _vmem_limit_bytes():
    """Generation-aware scoped-VMEM limit (~60% of physical capacity)."""
    cap = 128 * 1024 * 1024
    try:
        info = pltpu.get_tpu_info()
        cap = int(getattr(info, "vmem_capacity_bytes", cap))
    except Exception:
        pass
    # ~40% headroom for compiler-internal scratch; matters most on v7x (64 MiB)
    return min(int(cap * 0.6), 96 * 1024 * 1024)


def _mosaic_params(dims):
    return pltpu.CompilerParams(dimension_semantics=dims,
                                vmem_limit_bytes=_vmem_limit_bytes())


# ----------------------------------------------------------------------------
# Kernel 1: tiled matmul  y = act(x @ w + b)   (bf16 MXU, f32 accumulate)
# ----------------------------------------------------------------------------
def _matmul_kernel(x_ref, w_ref, b_ref, o_ref, acc_ref, *, activation):
    k = pl.program_id(2)

    @pl.when(k == 0)
    def _():
        acc_ref[...] = jnp.zeros_like(acc_ref)

    # operands are already bf16 (weights pre-cast at init, activations bf16)
    acc_ref[...] += jnp.dot(x_ref[...], w_ref[...],
                            preferred_element_type=jnp.float32)

    @pl.when(k == pl.num_programs(2) - 1)
    def _():
        y = acc_ref[...] + b_ref[...].astype(jnp.float32)
        if activation == "gelu":      # exact (erf-based) GELU, as in HF BERT
            y = jax.nn.gelu(y, approximate=False)
        elif activation == "tanh":    # BERT pooler activation
            y = jnp.tanh(y)
        o_ref[...] = y.astype(o_ref.dtype)


def linear(x, w, b, activation=None, out_dtype=jnp.bfloat16):
    """y = act(x @ w + b).  x:(M,K) bf16, w:(K,N) bf16, b:(N,) f32."""
    M, K = x.shape
    N = w.shape[1]
    tm = _pick_tile(M, 256, mult=8)
    tn = _pick_tile(N, 512, mult=128)
    tk = _pick_tile(K, 512, mult=128)
    kernel = functools.partial(_matmul_kernel, activation=activation)
    return pl.pallas_call(
        kernel,
        out_shape=jax.ShapeDtypeStruct((M, N), out_dtype),
        grid=(M // tm, N // tn, K // tk),
        in_specs=[
            pl.BlockSpec((tm, tk), lambda i, j, k: (i, k)),
            pl.BlockSpec((tk, tn), lambda i, j, k: (k, j)),
            pl.BlockSpec((1, tn), lambda i, j, k: (0, j)),
        ],
        out_specs=pl.BlockSpec((tm, tn), lambda i, j, k: (i, j)),
        scratch_shapes=[pltpu.VMEM((tm, tn), jnp.float32)],
        compiler_params=_mosaic_params(("parallel", "parallel", "arbitrary")),
    )(x, w, b.reshape(1, N))


# ----------------------------------------------------------------------------
# Kernel 2: tiled matmul with fused bias + residual + LayerNorm epilogue
#           out = LayerNorm(x @ w + b + res)
# ----------------------------------------------------------------------------
def _matmul_res_ln_kernel(x_ref, w_ref, b_ref, r_ref, g_ref, be_ref,
                          o_ref, acc_ref):
    k = pl.program_id(1)

    @pl.when(k == 0)
    def _():
        acc_ref[...] = jnp.zeros_like(acc_ref)

    acc_ref[...] += jnp.dot(x_ref[...], w_ref[...],
                            preferred_element_type=jnp.float32)

    @pl.when(k == pl.num_programs(1) - 1)
    def _():
        h = (acc_ref[...] + b_ref[...].astype(jnp.float32)
             + r_ref[...].astype(jnp.float32))
        mu = jnp.mean(h, axis=-1, keepdims=True)
        var = jnp.maximum(jnp.mean(h * h, axis=-1, keepdims=True) - mu * mu, 0.0)
        hn = (h - mu) * jax.lax.rsqrt(var + LN_EPS)
        o_ref[...] = (hn * g_ref[...].astype(jnp.float32)
                      + be_ref[...].astype(jnp.float32)).astype(o_ref.dtype)


def linear_residual_layernorm(x, w, b, res, gamma, beta,
                              out_dtype=jnp.bfloat16):
    """LayerNorm(x @ w + b + res) over the hidden axis.  x:(M,K) w:(K,H)."""
    M, K = x.shape
    H = w.shape[1]
    tm = _pick_tile(M, 256, mult=8)
    tk = _pick_tile(K, 512, mult=128)
    return pl.pallas_call(
        _matmul_res_ln_kernel,
        out_shape=jax.ShapeDtypeStruct((M, H), out_dtype),
        grid=(M // tm, K // tk),
        in_specs=[
            pl.BlockSpec((tm, tk), lambda i, k: (i, k)),
            pl.BlockSpec((tk, H), lambda i, k: (k, 0)),
            pl.BlockSpec((1, H), lambda i, k: (0, 0)),
            pl.BlockSpec((tm, H), lambda i, k: (i, 0)),
            pl.BlockSpec((1, H), lambda i, k: (0, 0)),
            pl.BlockSpec((1, H), lambda i, k: (0, 0)),
        ],
        out_specs=pl.BlockSpec((tm, H), lambda i, k: (i, 0)),
        scratch_shapes=[pltpu.VMEM((tm, H), jnp.float32)],
        compiler_params=_mosaic_params(("parallel", "arbitrary")),
    )(x, w, b.reshape(1, H), res, gamma.reshape(1, H), beta.reshape(1, H))


# ----------------------------------------------------------------------------
# Kernel 3: plain LayerNorm (embedding output — no residual input)
# ----------------------------------------------------------------------------
def _layernorm_kernel(x_ref, g_ref, b_ref, o_ref):
    h = x_ref[...].astype(jnp.float32)
    mu = jnp.mean(h, axis=-1, keepdims=True)
    var = jnp.maximum(jnp.mean(h * h, axis=-1, keepdims=True) - mu * mu, 0.0)
    o_ref[...] = ((h - mu) * jax.lax.rsqrt(var + LN_EPS) * g_ref[...]
                  + b_ref[...]).astype(o_ref.dtype)


def layernorm(x, gamma, beta, out_dtype=jnp.bfloat16):
    M, H = x.shape
    tm = _pick_tile(M, 256, mult=8)
    return pl.pallas_call(
        _layernorm_kernel,
        out_shape=jax.ShapeDtypeStruct((M, H), out_dtype),
        grid=(M // tm,),
        in_specs=[
            pl.BlockSpec((tm, H), lambda i: (i, 0)),
            pl.BlockSpec((1, H), lambda i: (0, 0)),
            pl.BlockSpec((1, H), lambda i: (0, 0)),
        ],
        out_specs=pl.BlockSpec((tm, H), lambda i: (i, 0)),
        compiler_params=_mosaic_params(("parallel",)),
    )(x, gamma.reshape(1, H), beta.reshape(1, H))


# ----------------------------------------------------------------------------
# Kernel 4: self-attention.
#   grid = (B, S // tq), both 'parallel' (megacore even at B=1).
#   The q/k/v blocks come straight out of the fused (B*S, 3H) qkv buffer via
#   column-block index_maps (no wrapper-side slicing).  1/sqrt(dh) is folded
#   into q once; each head's context is drained into a (tq, H) f32 scratch as
#   soon as it is produced (no 12-way f32 concat / live partials), followed by
#   a single lane-dense bf16 store.
# ----------------------------------------------------------------------------
def _attention_kernel(q_ref, k_ref, v_ref, bias_ref, o_ref, acc_ref,
                      *, n_heads, head_dim, scale):
    bias = bias_ref[0]                      # (1, S) additive mask bias, f32
    q_all = q_ref[...] * scale              # (tq, H) bf16; scale folded once
    k_all = k_ref[...]                      # (S, H)
    v_all = v_ref[...]
    for h in range(n_heads):
        lo = h * head_dim
        hi = lo + head_dim
        q = q_all[:, lo:hi]
        k = k_all[:, lo:hi]
        v = v_all[:, lo:hi]
        s = jnp.dot(q, k.T, preferred_element_type=jnp.float32) + bias  # (tq,S)
        m = jnp.max(s, axis=-1, keepdims=True)
        p = jnp.exp(s - m)
        p = p * pl.reciprocal(jnp.sum(p, axis=-1, keepdims=True), approx=True)
        acc_ref[:, lo:hi] = jnp.dot(p.astype(v.dtype), v,
                                    preferred_element_type=jnp.float32)
    o_ref[...] = acc_ref[...].astype(o_ref.dtype)      # single dense store


def attention(qkv, mask_bias, n_heads, head_dim, seq_len):
    """qkv:(B*S, 3H) bf16 (fused Q|K|V columns), mask_bias:(B,1,S) f32."""
    BS, H3 = qkv.shape
    H = H3 // 3
    B = mask_bias.shape[0]
    S = seq_len
    tq = _pick_tile(S, 256, mult=8)
    n_q = S // tq
    scale = 1.0 / math.sqrt(head_dim)
    kernel = functools.partial(_attention_kernel, n_heads=n_heads,
                               head_dim=head_dim, scale=scale)
    return pl.pallas_call(
        kernel,
        out_shape=jax.ShapeDtypeStruct((BS, H), jnp.bfloat16),
        grid=(B, n_q),
        in_specs=[
            pl.BlockSpec((tq, H), lambda b, qi: (b * n_q + qi, 0)),  # Q cols
            pl.BlockSpec((S, H), lambda b, qi: (b, 1)),              # K cols
            pl.BlockSpec((S, H), lambda b, qi: (b, 2)),              # V cols
            pl.BlockSpec((1, 1, S), lambda b, qi: (b, 0, 0)),        # mask bias
        ],
        out_specs=pl.BlockSpec((tq, H), lambda b, qi: (b * n_q + qi, 0)),
        scratch_shapes=[pltpu.VMEM((tq, H), jnp.float32)],
        compiler_params=_mosaic_params(("parallel", "parallel")),
    )(qkv, qkv, qkv, mask_bias)


# ----------------------------------------------------------------------------
# Parameter initialization (deterministic, synthetic — no checkpoint load).
# All matmul weights and embedding tables are stored in bf16 (MXU-native);
# biases and LayerNorm affine params stay f32 (added to f32 accumulators).
# ----------------------------------------------------------------------------
def init_params(key, cfg):
    H, I, C = cfg["hidden"], cfg["intermediate"], cfg["num_classes"]

    def nrm(k, shape, dtype=jnp.bfloat16):
        return (0.02 * jax.random.normal(k, shape, jnp.float32)).astype(dtype)

    n_rand = 5 + 4 * cfg["n_layers"]
    keys = iter(jax.random.split(key, n_rand))

    params = {
        "word_emb": nrm(next(keys), (cfg["vocab"], H)),
        "pos_emb": nrm(next(keys), (cfg["max_pos"], H)),
        "type_emb": nrm(next(keys), (cfg["type_vocab"], H)),
        "emb_ln_g": jnp.ones((H,), jnp.float32),
        "emb_ln_b": jnp.zeros((H,), jnp.float32),
        "pool_w": nrm(next(keys), (H, H)),
        "pool_b": jnp.zeros((H,), jnp.float32),
        "layers": [],
    }
    for _ in range(cfg["n_layers"]):
        lp = {
            # fused Q/K/V projection: (H, 3H) == concat(wq, wk, wv) columns
            "wqkv": nrm(next(keys), (H, 3 * H)),
            "bqkv": jnp.zeros((3 * H,), jnp.float32),
            "wo": nrm(next(keys), (H, H)), "bo": jnp.zeros((H,), jnp.float32),
            "ln1_g": jnp.ones((H,), jnp.float32),
            "ln1_b": jnp.zeros((H,), jnp.float32),
            "w1": nrm(next(keys), (H, I)), "b1": jnp.zeros((I,), jnp.float32),
            "w2": nrm(next(keys), (I, H)), "b2": jnp.zeros((H,), jnp.float32),
            "ln2_g": jnp.ones((H,), jnp.float32),
            "ln2_b": jnp.zeros((H,), jnp.float32),
        }
        params["layers"].append(lp)

    # classifier head (nn.Linear(hidden, num_classes)), lane-padded to 128 so
    # the output store is dense; the real columns are sliced in the wrapper.
    cls_w = 0.02 * jax.random.normal(next(keys), (H, C), jnp.float32)
    n_pad = max(128, C)
    params["cls_w_pad"] = (jnp.zeros((H, n_pad), jnp.float32)
                           .at[:, :C].set(cls_w).astype(jnp.bfloat16))
    params["cls_b_pad"] = jnp.zeros((n_pad,), jnp.float32)
    return params


# ----------------------------------------------------------------------------
# Forward pass:  BERT encoder -> pooler -> dropout(identity) -> classifier
# ----------------------------------------------------------------------------
def bert_for_quantized_classification(params, input_ids, attention_mask, cfg):
    B, S = input_ids.shape
    H = cfg["hidden"]
    nh, dh = cfg["n_heads"], cfg["head_dim"]

    # --- embeddings (gathers are plain-JAX glue in bf16; LN is a kernel) ----
    pos_ids = jnp.arange(S)
    tok_type = jnp.zeros((B, S), jnp.int32)
    emb = (params["word_emb"][input_ids]
           + params["pos_emb"][pos_ids][None, :, :]
           + params["type_emb"][tok_type])                         # bf16
    x = layernorm(emb.reshape(B * S, H),
                  params["emb_ln_g"], params["emb_ln_b"])           # bf16

    # additive attention-mask bias, computed ONCE and reused by every layer
    mask_bias = ((1.0 - attention_mask.astype(jnp.float32))
                 * (-1e9)).reshape(B, 1, S)

    # --- transformer encoder layers -----------------------------------------
    for lp in params["layers"]:
        qkv = linear(x, lp["wqkv"], lp["bqkv"])                     # (B*S, 3H)
        ctx = attention(qkv, mask_bias, nh, dh, S)                  # (B*S, H)
        # attention output projection fused with residual + LayerNorm
        x = linear_residual_layernorm(ctx, lp["wo"], lp["bo"], x,
                                      lp["ln1_g"], lp["ln1_b"])
        # FFN: up-proj + GELU, then down-proj fused with residual + LayerNorm
        ffn = linear(x, lp["w1"], lp["b1"], activation="gelu")
        x = linear_residual_layernorm(ffn, lp["w2"], lp["b2"], x,
                                      lp["ln2_g"], lp["ln2_b"])

    # --- pooler: tanh(W_p * hidden[:, 0] + b_p)  == outputs[1] ---------------
    hidden = x.reshape(B, S, H)
    cls_tok = hidden[:, 0, :]
    pooled = linear(cls_tok, params["pool_w"], params["pool_b"],
                    activation="tanh")

    # nn.Dropout(0.1) is the identity in eval/inference mode.
    # --- classifier (lane-padded weights, slice the real logits) -------------
    logits = linear(pooled, params["cls_w_pad"], params["cls_b_pad"],
                    out_dtype=jnp.float32)[:, :cfg["num_classes"]]
    return logits


# ----------------------------------------------------------------------------
if __name__ == "__main__":
    # Small but layout-friendly demo shapes (hidden multiple of 128 so the
    # qkv column-block BlockSpecs are lane-aligned; head_dim matches BERT's 64).
    cfg = dict(vocab=64, hidden=128, n_layers=2, n_heads=2, head_dim=64,
               intermediate=512, max_pos=16, type_vocab=2, num_classes=3)

    key = jax.random.PRNGKey(0)
    pkey, dkey = jax.random.split(key)
    params = init_params(pkey, cfg)

    B, S = 2, 8
    input_ids = jax.random.randint(dkey, (B, S), 0, cfg["vocab"],
                                   dtype=jnp.int32)
    attention_mask = jnp.ones((B, S), jnp.int32)

    logits = bert_for_quantized_classification(params, input_ids,
                                               attention_mask, cfg)
    logits = jax.block_until_ready(logits)
    assert logits.shape == (B, cfg["num_classes"])
    assert bool(jnp.all(jnp.isfinite(logits)))
    print("KERNEL_OK")
</pallas_src>

<mosaic_0001>
module attributes {stable_mosaic.version = 11 : i64} {
  func.func @_layernorm_kernel(%arg0: i32, %arg1: memref<16x128xbf16, #tpu.memory_space<vmem>>, %arg2: memref<1x128xf32, #tpu.memory_space<vmem>>, %arg3: memref<1x128xf32, #tpu.memory_space<vmem>>, %arg4: memref<16x128xbf16, #tpu.memory_space<vmem>>) attributes {dimension_semantics = [#tpu.dimension_semantics<parallel>], iteration_bounds = array<i64: 1>, scalar_prefetch = 0 : i64, scratch_operands = 0 : i64, tpu.core_type = #tpu.core_type<tc>, window_params = [{transform_indices = @transform_0, window_bounds = array<i64: 16, 128>}, {pipeline_mode = #tpu.pipeline_mode<synchronous>, transform_indices = @transform_1, window_bounds = array<i64: 1, 128>}, {pipeline_mode = #tpu.pipeline_mode<synchronous>, transform_indices = @transform_2, window_bounds = array<i64: 1, 128>}, {transform_indices = @transform_3, window_bounds = array<i64: 16, 128>}]} {
    %c0 = arith.constant 0 : index
    %c0_0 = arith.constant 0 : index
    %0 = vector.load %arg1[%c0, %c0_0] : memref<16x128xbf16, #tpu.memory_space<vmem>>, vector<16x128xbf16>
    %1 = arith.extf %0 : vector<16x128xbf16> to vector<16x128xf32>
    %cst = arith.constant dense<0.000000e+00> : vector<16xf32>
    %2 = vector.multi_reduction <add>, %1, %cst [1] : vector<16x128xf32> to vector<16xf32>
    %3 = vector.shape_cast %2 : vector<16xf32> to vector<16x1xf32>
    %cst_1 = arith.constant 1.280000e+02 : f32
    %4 = vector.broadcast %cst_1 : f32 to vector<16x1xf32>
    %5 = arith.divf %3, %4 : vector<16x1xf32>
    %6 = arith.mulf %1, %1 : vector<16x128xf32>
    %cst_2 = arith.constant dense<0.000000e+00> : vector<16xf32>
    %7 = vector.multi_reduction <add>, %6, %cst_2 [1] : vector<16x128xf32> to vector<16xf32>
    %8 = vector.shape_cast %7 : vector<16xf32> to vector<16x1xf32>
    %cst_3 = arith.constant 1.280000e+02 : f32
    %9 = vector.broadcast %cst_3 : f32 to vector<16x1xf32>
    %10 = arith.divf %8, %9 : vector<16x1xf32>
    %11 = arith.mulf %5, %5 : vector<16x1xf32>
    %12 = arith.subf %10, %11 : vector<16x1xf32>
    %cst_4 = arith.constant 0.000000e+00 : f32
    %13 = vector.broadcast %cst_4 : f32 to vector<16x1xf32>
    %14 = arith.maximumf %12, %13 : vector<16x1xf32>
    %15 = vector.broadcast %5 : vector<16x1xf32> to vector<16x128xf32>
    %16 = arith.subf %1, %15 : vector<16x128xf32>
    %cst_5 = arith.constant 9.99999996E-13 : f32
    %17 = vector.broadcast %cst_5 : f32 to vector<16x1xf32>
    %18 = arith.addf %14, %17 : vector<16x1xf32>
    %19 = math.rsqrt %18 : vector<16x1xf32>
    %20 = vector.broadcast %19 : vector<16x1xf32> to vector<16x128xf32>
    %21 = arith.mulf %16, %20 : vector<16x128xf32>
    %c0_6 = arith.constant 0 : index
    %c0_7 = arith.constant 0 : index
    %22 = vector.load %arg2[%c0_6, %c0_7] : memref<1x128xf32, #tpu.memory_space<vmem>>, vector<1x128xf32>
    %23 = vector.broadcast %22 : vector<1x128xf32> to vector<16x128xf32>
    %24 = arith.mulf %21, %23 : vector<16x128xf32>
    %c0_8 = arith.constant 0 : index
    %c0_9 = arith.constant 0 : index
    %25 = vector.load %arg3[%c0_8, %c0_9] : memref<1x128xf32, #tpu.memory_space<vmem>>, vector<1x128xf32>
    %26 = vector.broadcast %25 : vector<1x128xf32> to vector<16x128xf32>
    %27 = arith.addf %24, %26 : vector<16x128xf32>
    %28 = arith.truncf %27 : vector<16x128xf32> to vector<16x128xbf16>
    %c0_10 = arith.constant 0 : index
    %c0_11 = arith.constant 0 : index
    %29 = vector.load %arg4[%c0_10, %c0_11] : memref<16x128xbf16, #tpu.memory_space<vmem>>, vector<16x128xbf16>
    tpu.vector_store %arg4[%c0_10, %c0_11], %28 {strides = array<i32>} : memref<16x128xbf16, #tpu.memory_space<vmem>>, vector<16x128xbf16>,
    return
  }
  func.func @transform_0(%arg0: i32) -> (i32, i32) {
    %c0_i32 = arith.constant 0 : i32
    %c0_i32_0 = arith.constant 0 : i32
    return %arg0, %c0_i32 : i32, i32
  }
  func.func @transform_1(%arg0: i32) -> (i32, i32) {
    %c0_i32 = arith.constant 0 : i32
    %c0_i32_0 = arith.constant 0 : i32
    %c0_i32_1 = arith.constant 0 : i32
    return %c0_i32, %c0_i32_0 : i32, i32
  }
  func.func @transform_2(%arg0: i32) -> (i32, i32) {
    %c0_i32 = arith.constant 0 : i32
    %c0_i32_0 = arith.constant 0 : i32
    %c0_i32_1 = arith.constant 0 : i32
    return %c0_i32, %c0_i32_0 : i32, i32
  }
  func.func @transform_3(%arg0: i32) -> (i32, i32) {
    %c0_i32 = arith.constant 0 : i32
    %c0_i32_0 = arith.constant 0 : i32
    return %arg0, %c0_i32 : i32, i32
  }
}

</mosaic_0001>

<llo_original>
// kernel: tpu_custom_call.1
$region0: #{tpu_custom_call.1}
  #allocation0 [shape = 'u32[]', space=smem, size = 0x4, offset = 0x4, fixed_abs, tag = 'smem constant byte address 0x4 - core index']
  #allocation1 [shape = 'u32[144,128]{1,0:T(1,128)}', space=vmem, size = 0x12000, scoped, tag = 'internal scratch']
  %s0 = inlined_call_operand.hbm [shape: bf16[16,128], index: 0, kind: input, shape index: {}]
  %s1 = inlined_call_operand.vmem [shape: f32[1,128], index: 1, kind: input, shape index: {}]
  %s2 = inlined_call_operand.vmem [shape: f32[1,128], index: 2, kind: input, shape index: {}]
  %s3 = inlined_call_operand.hbm [shape: bf16[16,128], index: 3, kind: output, shape index: {}]
  %s4 = sld [smem:[#allocation0]]
  $region26: #{tpu_custom_call.1} parent=0
    _
  %s6 = ssub.s32 1, %s4
  %s7 = scalar_select 0, %s6, %s4
  $region1: #{tpu_custom_call.1} parent=0
    #allocation2 [shape = 'u8[4096]{0}', space=vmem, size = 0x1000, scoped, tag = 'input window, operand 0, single buffered']
    #allocation3 [shape = 's32[1]{0}', space=sflag, size = 0x4, scoped, tag = 'scoped memory for tpu_custom_call.1']
    #allocation4 [shape = 's32[1]{0}', space=sflag, size = 0x4, scoped, tag = 'scoped memory for tpu_custom_call.1']
    #allocation5 [shape = 'u8[4096]{0}', space=vmem, size = 0x1000, scoped, tag = 'output window, operand 0, single buffered']
    %8 = vsyncpa [#allocation3], 0
    %9 = vsyncpa [#allocation4], 0
    // Predicated region
    $region2: #{tpu_custom_call.1} parent=1 // pred_check
      _
    $region3: #{tpu_custom_call.1} parent=1 // pred_check_branch
      %11 = sbr.rel (0) target = $region5
    $region4: #{tpu_custom_call.1} parent=1 // pred_region
      %s13 = ssub.s32 128, 128
      %14 = vsyncadd [#allocation3], %s13
      %s15 = sshll.u32 [#allocation2], 4
      %s16 = int_to_ptr.vmem [resolvable:$true] %s15
      %21 = dma.hbm_to_vmem [thread:$0]  %s0, 128, %s16, [#allocation3], 64, 64, 4
    $region5: #{tpu_custom_call.1} parent=1 // pred_fallthru
      _
    // Predicated region
    $region6: #{tpu_custom_call.1} parent=1 // pred_check
      _
    $region7: #{tpu_custom_call.1} parent=1 // pred_check_branch
      %23 = sbr.rel (0) target = $region9
    $region8: #{tpu_custom_call.1} parent=1 // pred_region
      _
    $region9: #{tpu_custom_call.1} parent=1 // pred_fallthru
      _
    // Predicated region
    $region10: #{tpu_custom_call.1} parent=1 // pred_check
      _
    $region11: #{tpu_custom_call.1} parent=1 // pred_check_branch
      %25 = sbr.rel (0) target = $region13
    $region12: #{tpu_custom_call.1} parent=1 // pred_region
      _
    $region13: #{tpu_custom_call.1} parent=1 // pred_fallthru
      _
    // Predicated region
    $region14: #{tpu_custom_call.1} parent=1 // pred_check
      _
    $region15: #{tpu_custom_call.1} parent=1 // pred_check_branch
      %27 = sbr.rel (0) target = $region17
    $region16: #{tpu_custom_call.1} parent=1 // pred_region
      %28 = dma.done [#allocation3], 128
    $region17: #{tpu_custom_call.1} parent=1 // pred_fallthru
      _
    %v29 = vld [vmem:[#allocation2] sm:$0xf]
    %v30 = vld [vmem:[#allocation2 + $0x4] sm:$0xf]
    %v31 = vunpack.c.l.bf16 %v29
    %v32 = vunpack.c.l.bf16 %v30
    %33 = vadd.xlane.f32.xlu0 %v31
    %v34 = vpop.xlane.xlu0 %33
    %35 = vadd.xlane.f32.xlu0 %v32
    %v36 = vpop.xlane.xlu0 %35
    %v37 = vrcp.pop 128.0
    %v38 = vmul.f32 %v34, %v37
    %v39 = vmul.f32 %v36, %v37
    %v40 = vmul.f32 %v31, %v31
    %v41 = vmul.f32 %v32, %v32
    %42 = vadd.xlane.f32.xlu0 %v40
    %v43 = vpop.xlane.xlu0 %42
    %44 = vadd.xlane.f32.xlu0 %v41
    %v45 = vpop.xlane.xlu0 %44
    %v46 = vmul.f32 %v43, %v37
    %v47 = vmul.f32 %v45, %v37
    %v48 = vmul.f32 %v38, %v38
    %v49 = vmul.f32 %v39, %v39
    %v50 = vsub.f32 %v46, %v48
    %v51 = vsub.f32 %v47, %v49
    %v52 = vmax.f32 %v50, 0.0
    %v53 = vmax.f32 %v51, 0.0
    %v54 = vsub.f32 %v31, %v38
    %v55 = vsub.f32 %v32, %v39
    %v56 = vadd.f32 %v52, 1e-12
    %v57 = vadd.f32 %v53, 1e-12
    %v58 = vrsqrt.pop %v56
    %v59 = vrsqrt.pop %v57
    %v60 = vmul.f32 %v54, %v58
    %v61 = vmul.f32 %v55, %v59
    %v62 = vld [vmem:[%s1] sm:$0x1]
    %v64 = vlaneseq
    %v65 = vshrl.u32 %v64, 7
    %v66 = vsub.s32 0, %v65
    %v67 = vrot.slane %v62, %v66
    %v69 = vmul.f32 %v60, %v67
    %v70 = vmul.f32 %v61, %v67
    %v71 = vld [vmem:[%s2] sm:$0x1]
    %v73 = vlaneseq
    %v74 = vshrl.u32 %v73, 7
    %v75 = vsub.s32 0, %v74
    %v76 = vrot.slane %v71, %v75
    %v78 = vadd.f32 %v69, %v76
    %v79 = vadd.f32 %v70, %v76
    %v80 = vpack.c.bf16 %v79, %v78
    %v82 = vunpack.c.l.b16 %v80
    %v83 = vunpack.c.h.b16 %v80
    %v84 = vpack.c.b16 %v82, %v82
    %v85 = vpack.c.b16 %v83, %v83
    %88 = vst [vmem:[#allocation5] sm:$0xf] %v84
    %89 = vst [vmem:[#allocation5 + $0x4] sm:$0xf] %v85
    // Predicated region
    $region18: #{tpu_custom_call.1} parent=1 // pred_check
      _
    $region19: #{tpu_custom_call.1} parent=1 // pred_check_branch
      %91 = sbr.rel (0) target = $region21
    $region20: #{tpu_custom_call.1} parent=1 // pred_region
      %s93 = ssub.s32 128, 128
      %94 = vsyncadd [#allocation4], %s93
      %s95 = sshll.u32 [#allocation5], 4
      %s96 = int_to_ptr.vmem [resolvable:$true] %s95
      %101 = dma.vmem_to_hbm [thread:$0]  %s96, 128, %s3, [#allocation4], 64, 64, 4
    $region21: #{tpu_custom_call.1} parent=1 // pred_fallthru
      _
    // Predicated region
    $region22: #{tpu_custom_call.1} parent=1 // pred_check
      _
    $region23: #{tpu_custom_call.1} parent=1 // pred_check_branch
      %103 = sbr.rel (0) target = $region25
    $region24: #{tpu_custom_call.1} parent=1 // pred_region
      %104 = dma.done [#allocation4], 128
    $region25: #{tpu_custom_call.1} parent=1 // pred_fallthru
      _
    %105 = vsyncpa [#allocation3], 1
    %106 = vsyncpa [#allocation4], 1

</llo_original>
